<compile_context>
chip_gen: v7x
topology: tpu7x:2x2x1
jax: 0.10.0
libtpu: 0.0.40
codegen_flags: <defaults>
</compile_context>

<pallas_src>
import functools

import jax
import jax.numpy as jnp
from jax import lax
from jax.experimental import pallas as pl
from jax.experimental.pallas import tpu as pltpu


def _focal_loss_kernel(x_ref, tgt_ref, w_ref, out_ref, *, gamma, n_valid,
                       block_rows, use_mxu_gather):
    """One (TN, C) logits tile -> (TN, 1) per-row focal losses (f32)."""
    pid = pl.program_id(0)

    x = x_ref[...]                                  # (TN, C), caller dtype
    tgt = tgt_ref[...]                              # (TN, 1) int32 labels

    tn, c = x.shape
    col = lax.broadcasted_iota(jnp.int32, (tn, c), 1)          # class indices

    # Row max in the native dtype (exact); upcast only the (TN,1) scalar.
    m_native = jnp.max(x, axis=1, keepdims=True)               # (TN,1)
    m = m_native.astype(jnp.float32)

    # denom = sum exp(x - m); subtraction/exp done in f32 (matches reference).
    denom = jnp.sum(jnp.exp(x.astype(jnp.float32) - m), axis=1, keepdims=True)
    log_denom = jnp.log(denom)

    # x_t[i] = x[i, target[i]]  (exactly one matching lane per row).
    x_masked = jnp.where(col == tgt, x, 0.0)                   # native dtype
    if use_mxu_gather:
        # Lane reduction on the idle MXU; exact (one nonzero per row, bf16 in,
        # f32 accumulate).
        ones_c = jnp.ones((c, 1), dtype=x.dtype)
        x_t = jnp.dot(x_masked, ones_c, preferred_element_type=jnp.float32)
    else:
        x_t = jnp.sum(x_masked, axis=1, keepdims=True).astype(jnp.float32)

    # -log p_t in log-sum-exp form (never inf); p_t recovered from it.
    neg_log_p = (m - x_t) + log_denom                          # (TN,1), >= 0
    p_t = jnp.exp(-neg_log_p)                                  # (TN,1)

    # (1 - p_t)**gamma; small integer gamma specialized at trace time.
    one_minus_p = jnp.maximum(1.0 - p_t, 0.0)
    g = float(gamma)
    if g == 0.0:
        mod = jnp.ones_like(p_t)
    elif g.is_integer() and 1 <= int(g) <= 4:
        mod = one_minus_p
        for _ in range(int(g) - 1):
            mod = mod * one_minus_p
    else:
        mod = jnp.power(one_minus_p, g)

    row_loss = mod * neg_log_p                                 # (TN,1)

    if w_ref is not None:
        w = w_ref[...].astype(jnp.float32)                     # (1, C)
        # pred = first argmax of the logits (== argmax of softmax); compare in
        # the native dtype.
        pred = jnp.min(jnp.where(x == m_native, col, c), axis=1, keepdims=True)
        # weight gathered at the *predicted* class (matches the reference).
        w_row = jnp.sum(jnp.where(col == pred, w, 0.0), axis=1, keepdims=True)
        row_loss = w_row * row_loss

    # Mask rows past the true batch size. The last tile may run past the end
    # of the (unpadded) arrays; jnp.where is a select, so out-of-range garbage
    # (even NaN/inf) never reaches the output.
    rows = pid * block_rows + lax.broadcasted_iota(jnp.int32, (tn, 1), 0)
    out_ref[...] = jnp.where(rows < n_valid, row_loss, 0.0)


def _vmem_capacity_bytes():
    try:
        return int(pltpu.get_tpu_info().vmem_capacity_bytes)
    except Exception:
        return 64 * 1024 * 1024   # conservative default (v7x per-core VMEM)


def focal_loss(logits, target, weight=None, gamma=0.0, block_rows=1024):
    """Pallas focal-loss forward.

    logits: (N, C) float32/bfloat16, target: (N,) int, weight: (C,) or None.
    Returns the scalar summed focal loss (float32).
    """
    assert gamma >= 0
    n, c = logits.shape
    itemsize = jnp.dtype(logits.dtype).itemsize

    # Sublane tiling unit: 8 for 32-bit, 16 for bf16, 32 for 8-bit dtypes.
    sublane = max(8, 32 // max(1, itemsize))

    # Generation- and dtype-aware row-tile budget; set the scoped-VMEM limit
    # to match (defaults: 16 MiB on v5e would otherwise be the ceiling).
    vmem_cap = _vmem_capacity_bytes()
    vmem_limit = int(min(vmem_cap // 2, 64 * 1024 * 1024))
    tile_budget = (vmem_limit * 2) // 3
    c_lanes = ((c + 127) // 128) * 128
    # 2 pipeline buffers of the logits tile + ~4 tile-wide f32 temporaries.
    per_row_bytes = c_lanes * (2 * itemsize + 4 * 4)
    rows_cap = max(sublane, tile_budget // per_row_bytes)

    tn = min(int(block_rows), n, int(rows_cap))
    if tn < n:
        tn = max(sublane, (tn // sublane) * sublane)
    num_tiles = (n + tn - 1) // tn

    tgt2d = target.astype(jnp.int32).reshape(n, 1)
    use_mxu_gather = (logits.dtype == jnp.bfloat16) and (c >= 128)
    has_weight = weight is not None

    kernel = functools.partial(
        _focal_loss_kernel, gamma=float(gamma), n_valid=n, block_rows=tn,
        use_mxu_gather=use_mxu_gather)

    in_specs = [
        pl.BlockSpec((tn, c), lambda i: (i, 0)),    # streamed logits tile
        pl.BlockSpec((tn, 1), lambda i: (i, 0)),    # per-tile targets
    ]
    args = [logits, tgt2d]
    if has_weight:
        in_specs.append(pl.BlockSpec((1, c), lambda i: (0, 0)))  # resident weights
        args.append(weight.astype(jnp.float32).reshape(1, c))
        body = kernel
    else:
        def body(x_ref, t_ref, o_ref):              # weight-None fast path
            return kernel(x_ref, t_ref, None, o_ref)

    out = pl.pallas_call(
        body,
        out_shape=jax.ShapeDtypeStruct((num_tiles * tn, 1), jnp.float32),
        grid=(num_tiles,),
        in_specs=in_specs,
        out_specs=pl.BlockSpec((tn, 1), lambda i: (i, 0)),   # per-tile partials
        compiler_params=pltpu.CompilerParams(
            dimension_semantics=("parallel",),
            vmem_limit_bytes=vmem_limit),
    )(*args)

    # Tiny final reduction over the per-row partial losses.
    return jnp.sum(out)


def _focal_loss_ref(logits, target, weight, gamma):
    """Pure-JAX reference mirroring the PyTorch module."""
    z = jax.nn.softmax(logits.astype(jnp.float32), axis=1)
    p_t = jnp.take_along_axis(z, target[:, None].astype(jnp.int32), axis=1)[:, 0]
    pred = jnp.argmax(z, axis=1)
    w_row = weight[pred] if weight is not None else jnp.ones_like(p_t)
    return jnp.sum(w_row * jnp.power(1.0 - p_t, gamma) * (-jnp.log(p_t)))


if __name__ == "__main__":
    key = jax.random.PRNGKey(0)
    k1, k2, k3, k4, k5, k6 = jax.random.split(key, 6)

    cases = []

    # Small f32 case: N not a multiple of the row tile -> multi-step grid with
    # out-of-range rows in the last tile (exercises the unpadded-input mask).
    N1, C1 = 37, 16
    logits1 = jax.random.normal(k1, (N1, C1), dtype=jnp.float32)
    target1 = jax.random.randint(k2, (N1,), 0, C1, dtype=jnp.int32)
    weight1 = 0.5 + jax.random.uniform(k3, (C1,), dtype=jnp.float32)
    cases += [(logits1, target1, weight1, 2.0, 16),
              (logits1, target1, None, 0.0, 16),
              (logits1, target1, weight1, 1.5, 16)]

    # bf16 case with C >= 128: exercises the bf16 element-wise passes, the
    # 16-row sublane alignment, the MXU-assisted target gather, and the
    # weight-None fast path.
    N2, C2 = 100, 256
    logits2 = jax.random.normal(k4, (N2, C2), dtype=jnp.float32).astype(jnp.bfloat16)
    target2 = jax.random.randint(k5, (N2,), 0, C2, dtype=jnp.int32)
    weight2 = 0.5 + jax.random.uniform(k6, (C2,), dtype=jnp.float32)
    cases += [(logits2, target2, weight2, 1.5, 32),
              (logits2, target2, None, 2.0, 32)]

    ok = True
    for logits, target, weight, g, br in cases:
        loss = focal_loss(logits, target, weight=weight, gamma=g, block_rows=br)
        jax.block_until_ready(loss)
        ref = _focal_loss_ref(logits, target, weight, g)
        if not jnp.allclose(loss, ref, rtol=1e-5, atol=1e-4):
            ok = False
            print("MISMATCH", str(logits.dtype), g, weight is not None,
                  float(loss), float(ref))

    assert ok
    print("KERNEL_OK")
</pallas_src>

<mosaic_0001>
module attributes {stable_mosaic.version = 11 : i64} {
  func.func @_focal_loss_kernel(%arg0: i32, %arg1: memref<16x16xf32, #tpu.memory_space<vmem>>, %arg2: memref<16x1xi32, #tpu.memory_space<vmem>>, %arg3: memref<1x16xf32, #tpu.memory_space<vmem>>, %arg4: memref<16x1xf32, #tpu.memory_space<vmem>>) attributes {dimension_semantics = [#tpu.dimension_semantics<parallel>], iteration_bounds = array<i64: 3>, scalar_prefetch = 0 : i64, scratch_operands = 0 : i64, tpu.core_type = #tpu.core_type<tc>, window_params = [{transform_indices = @transform_0, window_bounds = array<i64: 16, 16>}, {transform_indices = @transform_1, window_bounds = array<i64: 16, 1>}, {pipeline_mode = #tpu.pipeline_mode<synchronous>, transform_indices = @transform_2, window_bounds = array<i64: 1, 16>}, {transform_indices = @transform_3, window_bounds = array<i64: 16, 1>}]} {
    %c0 = arith.constant 0 : index
    %c0_0 = arith.constant 0 : index
    %0 = vector.load %arg1[%c0, %c0_0] : memref<16x16xf32, #tpu.memory_space<vmem>>, vector<16x16xf32>
    %c0_1 = arith.constant 0 : index
    %c0_2 = arith.constant 0 : index
    %1 = vector.load %arg2[%c0_1, %c0_2] : memref<16x1xi32, #tpu.memory_space<vmem>>, vector<16x1xi32>
    %2 = tpu.iota {dimensions = array<i32: 1>} : vector<16x16xi32>
    %cst = arith.constant dense<0xFF800000> : vector<16xf32>
    %3 = vector.multi_reduction <maximumf>, %0, %cst [1] : vector<16x16xf32> to vector<16xf32>
    %4 = vector.shape_cast %3 : vector<16xf32> to vector<16x1xf32>
    %5 = vector.broadcast %4 : vector<16x1xf32> to vector<16x16xf32>
    %6 = arith.subf %0, %5 : vector<16x16xf32>
    %7 = math.exp %6 : vector<16x16xf32>
    %cst_3 = arith.constant dense<0.000000e+00> : vector<16xf32>
    %8 = vector.multi_reduction <add>, %7, %cst_3 [1] : vector<16x16xf32> to vector<16xf32>
    %9 = vector.shape_cast %8 : vector<16xf32> to vector<16x1xf32>
    %10 = math.log %9 : vector<16x1xf32>
    %11 = vector.broadcast %1 : vector<16x1xi32> to vector<16x16xi32>
    %12 = arith.cmpi eq, %2, %11 : vector<16x16xi32>
    %cst_4 = arith.constant 0.000000e+00 : f32
    %13 = vector.broadcast %cst_4 : f32 to vector<16x16xf32>
    %14 = arith.select %12, %0, %13 : vector<16x16xi1>, vector<16x16xf32>
    %cst_5 = arith.constant dense<0.000000e+00> : vector<16xf32>
    %15 = vector.multi_reduction <add>, %14, %cst_5 [1] : vector<16x16xf32> to vector<16xf32>
    %16 = vector.shape_cast %15 : vector<16xf32> to vector<16x1xf32>
    %17 = arith.subf %4, %16 : vector<16x1xf32>
    %18 = arith.addf %17, %10 : vector<16x1xf32>
    %cst_6 = arith.constant 0.000000e+00 : f32
    %19 = vector.broadcast %cst_6 : f32 to vector<16x1xf32>
    %20 = arith.subf %19, %18 : vector<16x1xf32>
    %21 = math.exp %20 : vector<16x1xf32>
    %cst_7 = arith.constant 1.000000e+00 : f32
    %22 = vector.broadcast %cst_7 : f32 to vector<16x1xf32>
    %23 = arith.subf %22, %21 : vector<16x1xf32>
    %cst_8 = arith.constant 0.000000e+00 : f32
    %24 = vector.broadcast %cst_8 : f32 to vector<16x1xf32>
    %25 = arith.maximumf %23, %24 : vector<16x1xf32>
    %26 = arith.mulf %25, %25 : vector<16x1xf32>
    %27 = arith.mulf %26, %18 : vector<16x1xf32>
    %c0_9 = arith.constant 0 : index
    %c0_10 = arith.constant 0 : index
    %28 = vector.load %arg3[%c0_9, %c0_10] : memref<1x16xf32, #tpu.memory_space<vmem>>, vector<1x16xf32>
    %29 = vector.broadcast %4 : vector<16x1xf32> to vector<16x16xf32>
    %30 = arith.cmpf oeq, %0, %29 : vector<16x16xf32>
    %c16_i32 = arith.constant 16 : i32
    %31 = vector.broadcast %c16_i32 : i32 to vector<16x16xi32>
    %32 = arith.select %30, %2, %31 : vector<16x16xi1>, vector<16x16xi32>
    %cst_11 = arith.constant dense<2147483647> : vector<16xi32>
    %33 = vector.multi_reduction <minsi>, %32, %cst_11 [1] : vector<16x16xi32> to vector<16xi32>
    %34 = vector.shape_cast %33 : vector<16xi32> to vector<16x1xi32>
    %35 = vector.broadcast %34 : vector<16x1xi32> to vector<16x16xi32>
    %36 = arith.cmpi eq, %2, %35 : vector<16x16xi32>
    %cst_12 = arith.constant 0.000000e+00 : f32
    %37 = vector.shape_cast %28 : vector<1x16xf32> to vector<1x16xf32>
    %38 = vector.broadcast %37 : vector<1x16xf32> to vector<16x16xf32>
    %39 = vector.broadcast %cst_12 : f32 to vector<16x16xf32>
    %40 = arith.select %36, %38, %39 : vector<16x16xi1>, vector<16x16xf32>
    %cst_13 = arith.constant dense<0.000000e+00> : vector<16xf32>
    %41 = vector.multi_reduction <add>, %40, %cst_13 [1] : vector<16x16xf32> to vector<16xf32>
    %42 = vector.shape_cast %41 : vector<16xf32> to vector<16x1xf32>
    %43 = arith.mulf %42, %27 : vector<16x1xf32>
    %c16_i32_14 = arith.constant 16 : i32
    %44 = arith.muli %arg0, %c16_i32_14 : i32
    %45 = tpu.iota {dimensions = array<i32: 0>} : vector<16x1xi32>
    %46 = vector.broadcast %44 : i32 to vector<16x1xi32>
    %47 = arith.addi %46, %45 : vector<16x1xi32>
    %c37_i32 = arith.constant 37 : i32
    %48 = vector.broadcast %c37_i32 : i32 to vector<16x1xi32>
    %49 = arith.cmpi slt, %47, %48 : vector<16x1xi32>
    %cst_15 = arith.constant 0.000000e+00 : f32
    %50 = vector.broadcast %cst_15 : f32 to vector<16x1xf32>
    %51 = arith.select %49, %43, %50 : vector<16x1xi1>, vector<16x1xf32>
    %c0_16 = arith.constant 0 : index
    %c0_17 = arith.constant 0 : index
    %52 = vector.load %arg4[%c0_16, %c0_17] : memref<16x1xf32, #tpu.memory_space<vmem>>, vector<16x1xf32>
    tpu.vector_store %arg4[%c0_16, %c0_17], %51 {strides = array<i32>} : memref<16x1xf32, #tpu.memory_space<vmem>>, vector<16x1xf32>,
    return
  }
  func.func @transform_0(%arg0: i32) -> (i32, i32) {
    %c0_i32 = arith.constant 0 : i32
    %c0_i32_0 = arith.constant 0 : i32
    return %arg0, %c0_i32 : i32, i32
  }
  func.func @transform_1(%arg0: i32) -> (i32, i32) {
    %c0_i32 = arith.constant 0 : i32
    %c0_i32_0 = arith.constant 0 : i32
    return %arg0, %c0_i32 : i32, i32
  }
  func.func @transform_2(%arg0: i32) -> (i32, i32) {
    %c0_i32 = arith.constant 0 : i32
    %c0_i32_0 = arith.constant 0 : i32
    %c0_i32_1 = arith.constant 0 : i32
    return %c0_i32, %c0_i32_0 : i32, i32
  }
  func.func @transform_3(%arg0: i32) -> (i32, i32) {
    %c0_i32 = arith.constant 0 : i32
    %c0_i32_0 = arith.constant 0 : i32
    return %arg0, %c0_i32 : i32, i32
  }
}

</mosaic_0001>

<llo_original>
// kernel: tpu_custom_call.1
$region0: #{tpu_custom_call.1}
  #allocation0 [shape = 'u32[]', space=smem, size = 0x4, offset = 0x4, fixed_abs, tag = 'smem constant byte address 0x4 - core index']
  #allocation1 [shape = 'u32[144,128]{1,0:T(1,128)}', space=vmem, size = 0x12000, scoped, tag = 'internal scratch']
  %s0 = inlined_call_operand.vmem [shape: f32[37,16], index: 0, kind: input, shape index: {}]
  %s1 = inlined_call_operand.vmem [shape: s32[37,1], index: 1, kind: input, shape index: {}]
  %s2 = inlined_call_operand.vmem [shape: f32[1,16], index: 2, kind: input, shape index: {}]
  %s3 = inlined_call_operand.vmem [shape: f32[48,1], index: 3, kind: output, shape index: {}]
  %s4 = sld [smem:[#allocation0]]
  $region45: #{tpu_custom_call.1} parent=0
    _
  %s6 = ssub.s32 1, %s4
  %s7 = scalar_select 0, %s6, %s4
  loop: start=0, step=1, limit=5
  $region2: #{tpu_custom_call.1} parent=0 // loop_pre_header
    _
  $region3: #{tpu_custom_call.1} parent=0 // loop_header
    %s9 = sphi 0, %s13
    %p10 = scmp.ge.s32.totalorder %s9, 5
    %s19 = sphi 0, %s21
    %s22 = sphi 0, %s19
    %s23 = sphi 0, %s22
    %s39 = sphi 0, %s23
    %s45 = sphi 0, %s47
    %s48 = sphi 0, %s45
    %s49 = sphi 0, %s48
    %s65 = sphi 0, %s49
    %s69 = sphi 0, %s69
    %s71 = sphi 0, %s69
    %s72 = sphi 0, %s71
    %s86 = sphi 0, %s72
    %s92 = sphi 0, %s94
    %s95 = sphi 0, %s92
    %s96 = sphi 0, %s95
    %s112 = sphi 0, %s96
  $region4: #{tpu_custom_call.1} parent=0 // loop_header_branch
    %12 = sbr.rel (%p10) target = $region8
  $region5: #{tpu_custom_call.1} parent=0 // loop_body
    %s14 = ssub.s32 %s9, 1
    %s15 = ssub.s32 %s9, 2
    %s16 = sadd.s32 %s9, 1
    %s17 = ssub.s32 %s9, %s16
    %p18 = scmp.eq.s32.totalorder %s17, 0
    %s20 = sadd.s32 %s19, 1
    %s21 = scalar_select %p18, %s19, %s20
    %p24 = pneg %p18
    %p25 = scmp.eq.s32.totalorder %s9, 2
    %p26 = por %p24, %p25
    %p27 = scmp.ne.s32.totalorder %s19, %s22
    %p28 = scmp.eq.s32.totalorder %s9, 0
    %p29 = por %p27, %p28
    %p30 = scmp.ne.s32.totalorder %s19, %s22
    %p31 = scmp.eq.s32.totalorder %s14, 2
    %p32 = por %p30, %p31
    %p33 = scmp.ne.s32.totalorder %s22, %s23
    %p34 = scmp.eq.s32.totalorder %s14, 0
    %p35 = por %p33, %p34
    %p36 = scmp.ne.s32.totalorder %s22, %s23
    %p37 = scmp.eq.s32.totalorder %s15, 2
    %p38 = por %p36, %p37
    %p40 = scmp.ne.s32.totalorder %s23, %s39
    %p41 = scmp.eq.s32.totalorder %s15, 0
    %p42 = por %p40, %p41
    %s43 = ssub.s32 %s9, %s16
    %p44 = scmp.eq.s32.totalorder %s43, 0
    %s46 = sadd.s32 %s45, 1
    %s47 = scalar_select %p44, %s45, %s46
    %p50 = pneg %p44
    %p51 = scmp.eq.s32.totalorder %s9, 2
    %p52 = por %p50, %p51
    %p53 = scmp.ne.s32.totalorder %s45, %s48
    %p54 = scmp.eq.s32.totalorder %s9, 0
    %p55 = por %p53, %p54
    %p56 = scmp.ne.s32.totalorder %s45, %s48
    %p57 = scmp.eq.s32.totalorder %s14, 2
    %p58 = por %p56, %p57
    %p59 = scmp.ne.s32.totalorder %s48, %s49
    %p60 = scmp.eq.s32.totalorder %s14, 0
    %p61 = por %p59, %p60
    %p62 = scmp.ne.s32.totalorder %s48, %s49
    %p63 = scmp.eq.s32.totalorder %s15, 2
    %p64 = por %p62, %p63
    %p66 = scmp.ne.s32.totalorder %s49, %s65
    %p67 = scmp.eq.s32.totalorder %s15, 0
    %p68 = por %p66, %p67
    %s70 = sadd.s32 %s69, 1
    %p73 = scmp.eq.s32.totalorder %s9, 2
    %p74 = scmp.ne.s32.totalorder %s69, %s71
    %p75 = scmp.eq.s32.totalorder %s9, 0
    %p76 = por %p74, %p75
    %p77 = scmp.ne.s32.totalorder %s69, %s71
    %p78 = scmp.eq.s32.totalorder %s14, 2
    %p79 = por %p77, %p78
    %p80 = scmp.ne.s32.totalorder %s71, %s72
    %p81 = scmp.eq.s32.totalorder %s14, 0
    %p82 = por %p80, %p81
    %p83 = scmp.ne.s32.totalorder %s71, %s72
    %p84 = scmp.eq.s32.totalorder %s15, 2
    %p85 = por %p83, %p84
    %p87 = scmp.ne.s32.totalorder %s72, %s86
    %p88 = scmp.eq.s32.totalorder %s15, 0
    %p89 = por %p87, %p88
    %s90 = ssub.s32 %s9, %s16
    %p91 = scmp.eq.s32.totalorder %s90, 0
    %s93 = sadd.s32 %s92, 1
    %s94 = scalar_select %p91, %s92, %s93
    %p97 = pneg %p91
    %p98 = scmp.eq.s32.totalorder %s9, 2
    %p99 = por %p97, %p98
    %p100 = scmp.ne.s32.totalorder %s92, %s95
    %p101 = scmp.eq.s32.totalorder %s9, 0
    %p102 = por %p100, %p101
    %p103 = scmp.ne.s32.totalorder %s92, %s95
    %p104 = scmp.eq.s32.totalorder %s14, 2
    %p105 = por %p103, %p104
    %p106 = scmp.ne.s32.totalorder %s95, %s96
    %p107 = scmp.eq.s32.totalorder %s14, 0
    %p108 = por %p106, %p107
    %p109 = scmp.ne.s32.totalorder %s95, %s96
    %p110 = scmp.eq.s32.totalorder %s15, 2
    %p111 = por %p109, %p110
    %p113 = scmp.ne.s32.totalorder %s96, %s112
    %p114 = scmp.eq.s32.totalorder %s15, 0
    %p115 = por %p113, %p114
    %p116 = scmp.le.s32.totalorder 1, %s9
    %p117 = scmp.lt.s32.totalorder %s9, 4
    %p118 = pnand %p116, %p117
    %p119 = pneg %p118
    // Predicated region
    $region9: #{tpu_custom_call.1} parent=5 // pred_check
      _
    $region10: #{tpu_custom_call.1} parent=5 // pred_check_branch
      %121 = sbr.rel (%p118) target = $region12
    $region11: #{tpu_custom_call.1} parent=5 // pred_region
      %s122 = ssub.s32 %s9, 1
      // Predicated region
      $region13: #{tpu_custom_call.1} parent=11 // pred_check
        %p123 = pneg %p82
      $region14: #{tpu_custom_call.1} parent=11 // pred_check_branch
        %125 = sbr.rel (%p123) target = $region16
      $region15: #{tpu_custom_call.1} parent=11 // pred_region
        _
      $region16: #{tpu_custom_call.1} parent=11 // pred_fallthru
        _
    $region12: #{tpu_custom_call.1} parent=5 // pred_fallthru
      _
    %p126 = scmp.lt.s32.totalorder %s9, 3
    // Predicated region
    $region17: #{tpu_custom_call.1} parent=5 // pred_check
      %p127 = pneg %p126
    $region18: #{tpu_custom_call.1} parent=5 // pred_check_branch
      %129 = sbr.rel (%p127) target = $region20
    $region19: #{tpu_custom_call.1} parent=5 // pred_region
      // Predicated region
      $region21: #{tpu_custom_call.1} parent=19 // pred_check
        %p130 = pneg %p29
      $region22: #{tpu_custom_call.1} parent=19 // pred_check_branch
        %132 = sbr.rel (%p130) target = $region24
      $region23: #{tpu_custom_call.1} parent=19 // pred_region
        %s133 = smul.u32 2, %s9
        %s134 = ssub.s32 5, %s133
        %p135 = scmp.lt.s32.totalorder %s134, 2
        %s136 = scalar_select %p135, %s134, 2
        %s137 = smul.u32 128, %s136
        %p138 = scmp.lt.s32.totalorder %s133, 4
        %s139 = scalar_select %p138, %s133, 4
        %s140 = smul.addr %s139, 8
        %s141 = scalar_lea.vmem %s0, %s140
        %s142 = smul.u32 2, %s9
        %s143 = ssub.s32 5, %s142
        %p144 = scmp.lt.s32.totalorder %s143, 2
        %s145 = scalar_select %p144, %s143, 2
        %s146 = smul.u32 128, %s145
      $region24: #{tpu_custom_call.1} parent=19 // pred_fallthru
        _
      // Predicated region
      $region25: #{tpu_custom_call.1} parent=19 // pred_check
        %p147 = pneg %p55
      $region26: #{tpu_custom_call.1} parent=19 // pred_check_branch
        %149 = sbr.rel (%p147) target = $region28
      $region27: #{tpu_custom_call.1} parent=19 // pred_region
        %s150 = smul.u32 2, %s9
        %s151 = ssub.s32 5, %s150
        %p152 = scmp.lt.s32.totalorder %s151, 2
        %s153 = scalar_select %p152, %s151, 2
        %s154 = smul.u32 128, %s153
        %p155 = scmp.lt.s32.totalorder %s150, 4
        %s156 = scalar_select %p155, %s150, 4
        %s157 = smul.addr %s156, 8
        %s158 = scalar_lea.vmem %s1, %s157
        %s159 = smul.u32 2, %s9
        %s160 = ssub.s32 5, %s159
        %p161 = scmp.lt.s32.totalorder %s160, 2
        %s162 = scalar_select %p161, %s160, 2
        %s163 = smul.u32 128, %s162
      $region28: #{tpu_custom_call.1} parent=19 // pred_fallthru
        _
    $region20: #{tpu_custom_call.1} parent=5 // pred_fallthru
      _
    %p164 = scmp.le.s32.totalorder 1, %s9
    %p165 = scmp.lt.s32.totalorder %s9, 4
    %p166 = pnand %p164, %p165
    %p167 = pneg %p166
    // Predicated region
    $region29: #{tpu_custom_call.1} parent=5 // pred_check
      _
    $region30: #{tpu_custom_call.1} parent=5 // pred_check_branch
      %169 = sbr.rel (%p166) target = $region32
    $region31: #{tpu_custom_call.1} parent=5 // pred_region
      %s170 = ssub.s32 %s9, 1
      %s171 = smul.u32 2, %s14
      %s172 = ssub.s32 5, %s171
      %p173 = scmp.lt.s32.totalorder %s172, 2
      %s174 = scalar_select %p173, %s172, 2
      %s175 = smul.u32 128, %s174
      %p176 = scmp.lt.s32.totalorder %s171, 4
      %s177 = scalar_select %p176, %s171, 4
      %s178 = smul.addr %s177, 8
      %s179 = scalar_lea.vmem %s0, %s178
      %p180 = pneg %p35
      %p181 = pneg %p32
      %s182 = smul.u32 2, %s14
      %s183 = ssub.s32 5, %s182
      %p184 = scmp.lt.s32.totalorder %s183, 2
      %s185 = scalar_select %p184, %s183, 2
      %s186 = smul.u32 128, %s185
      %p187 = scmp.lt.s32.totalorder %s182, 4
      %s188 = scalar_select %p187, %s182, 4
      %s189 = smul.addr %s188, 8
      %s190 = scalar_lea.vmem %s1, %s189
      %p191 = pneg %p61
      %p192 = pneg %p58
      %p193 = pneg %p82
      %p194 = pneg %p79
      %p195 = pneg %p108
      %p196 = pneg %p105
      %s197 = smul.u32 2, %s14
      %p198 = scmp.lt.s32.totalorder %s197, 5
      %s199 = scalar_select %p198, %s197, 5
      %s200 = smul.addr %s199, 8
      %s201 = scalar_lea.vmem %s3, %s200
      %s202 = smul.u32 2, %s14
      %s203 = ssub.s32 5, %s202
      %p204 = scmp.lt.s32.totalorder %s203, 2
      %s205 = scalar_select %p204, %s203, 2
      %s206 = smul.u32 128, %s205
      %p207 = scmp.lt.s32.totalorder %s202, 4
      %s208 = scalar_select %p207, %s202, 4
      %s209 = smul.addr %s208, 8
      %s210 = scalar_lea.vmem %s0, %s209
      %s211 = smul.u32 2, %s14
      %s212 = ssub.s32 5, %s211
      %p213 = scmp.lt.s32.totalorder %s212, 2
      %s214 = scalar_select %p213, %s212, 2
      %s215 = smul.u32 128, %s214
      %s216 = smul.u32 2, %s14
      %s217 = ssub.s32 5, %s216
      %p218 = scmp.lt.s32.totalorder %s217, 2
      %s219 = scalar_select %p218, %s217, 2
      %s220 = smul.u32 128, %s219
      %p221 = scmp.lt.s32.totalorder %s216, 4
      %s222 = scalar_select %p221, %s216, 4
      %s223 = smul.addr %s222, 8
      %s224 = scalar_lea.vmem %s1, %s223
      %s225 = smul.u32 2, %s14
      %s226 = ssub.s32 5, %s225
      %p227 = scmp.lt.s32.totalorder %s226, 2
      %s228 = scalar_select %p227, %s226, 2
      %s229 = smul.u32 128, %s228
      %s230 = smul.u32 2, %s14
      %p231 = scmp.lt.s32.totalorder %s230, 5
      %s232 = scalar_select %p231, %s230, 5
      %s233 = smul.addr %s232, 8
      %s234 = scalar_lea.vmem %s3, %s233
      %s235 = smul.u32 2, %s14
      %v236 = vld [vmem:[%s210] sm:$0xff]
      %v237 = vld [vmem:[%s210 + $0x8] sm:$0xff]
      %v238 = vld [vmem:[%s224] sm:$0xff]
      %v239 = vld [vmem:[%s224 + $0x8] sm:$0xff]
      %v240 = vlaneseq
      %v241 = vand.u32 %v240, 127
      %vm242 = vcmask 130048
      %v243 = vsel %vm242, %v236, -inf
      %244 = vmax.xlane.f32.xlu0 %v243
      %v245 = vpop.xlane.xlu0 %244
      %v246 = vsel %vm242, %v237, -inf
      %247 = vmax.xlane.f32.xlu0 %v246
      %v248 = vpop.xlane.xlu0 %247
      %v249 = vsub.f32 %v236, %v245
      %v250 = vsub.f32 %v237, %v248
      %v251 = vmul.f32 %v249, 1.442695
      %v252 = vpow.pop %v251
      %v253 = vmul.f32 %v250, 1.442695
      %v254 = vpow.pop %v253
      %v255 = vsel %vm242, %v252, 0.0
      %256 = vadd.xlane.f32.xlu0 %v255
      %v257 = vpop.xlane.xlu0 %256
      %v258 = vsel %vm242, %v254, 0.0
      %259 = vadd.xlane.f32.xlu0 %v258
      %v260 = vpop.xlane.xlu0 %259
      %v261 = vlog2.pop %v257
      %v262 = vmul.f32 %v261, 0.6931472
      %v263 = vlog2.pop %v260
      %v264 = vmul.f32 %v263, 0.6931472
      %265 = vset.pattern.permute.xlu0 0
      %266 = vperm.xlu0 %265, %v238
      %v267 = vpop.permute.xlu0 %266
      %268 = vset.pattern.permute.xlu0 0
      %269 = vperm.xlu0 %268, %v239
      %v270 = vpop.permute.xlu0 %269
      %vm271 = vcmp.eq.s32.totalorder %v241, %v267
      %vm272 = vcmp.eq.s32.totalorder %v241, %v270
      %v273 = vsel %vm271, %v236, 0.0
      %v274 = vsel %vm272, %v237, 0.0
      %v275 = vsel %vm242, %v273, 0.0
      %276 = vadd.xlane.f32.xlu0 %v275
      %v277 = vpop.xlane.xlu0 %276
      %v278 = vsel %vm242, %v274, 0.0
      %279 = vadd.xlane.f32.xlu0 %v278
      %v280 = vpop.xlane.xlu0 %279
      %v281 = vsub.f32 %v245, %v277
      %v282 = vsub.f32 %v248, %v280
      %v283 = vadd.f32 %v281, %v262
      %v284 = vadd.f32 %v282, %v264
      %v285 = vsub.f32 0.0, %v283
      %v286 = vsub.f32 0.0, %v284
      %v287 = vmul.f32 %v285, 1.442695
      %v288 = vpow.pop %v287
      %v289 = vmul.f32 %v286, 1.442695
      %v290 = vpow.pop %v289
      %v291 = vsub.f32 1.0, %v288
      %v292 = vsub.f32 1.0, %v290
      %v293 = vmax.f32 %v291, 0.0
      %v294 = vmax.f32 %v292, 0.0
      %v295 = vmul.f32 %v293, %v293
      %v296 = vmul.f32 %v294, %v294
      %v297 = vmul.f32 %v295, %v283
      %v298 = vmul.f32 %v296, %v284
      %v299 = vld [vmem:[%s2] sm:$0x1]
      %vm300 = vcmp.eq.f32.partialorder %v236, %v245
      %vm301 = vcmp.eq.f32.partialorder %v237, %v248
      %v302 = vsel %vm300, %v241, 16
      %v303 = vsel %vm301, %v241, 16
      %v304 = vsel %vm242, %v302, 2147483647
      %v305 = vand.u32 %v304, 65535
      %v306 = vshra.s32 %v304, 16
      %v307 = vcvt.s32.f32 %v305
      %v308 = vcvt.s32.f32 %v306
      %309 = vmin.xlane.f32.xlu0 %v308
      %v310 = vpop.xlane.xlu0 %309
      %vm311 = vcmp.eq.f32.partialorder %v308, %v310
      %v312 = vsel %vm311, %v307, inf
      %313 = vmin.xlane.f32.xlu0 %v312
      %v314 = vpop.xlane.xlu0 %313
      %v315 = vcvt.f32.s32 %v314
      %v316 = vcvt.f32.s32 %v310
      %v317 = vshll.u32 %v316, 16
      %v318 = vadd.s32 %v317, %v315
      %v319 = vsel %vm242, %v303, 2147483647
      %v320 = vand.u32 %v319, 65535
      %v321 = vshra.s32 %v319, 16
      %v322 = vcvt.s32.f32 %v320
      %v323 = vcvt.s32.f32 %v321
      %324 = vmin.xlane.f32.xlu0 %v323
      %v325 = vpop.xlane.xlu0 %324
      %vm326 = vcmp.eq.f32.partialorder %v323, %v325
      %v327 = vsel %vm326, %v322, inf
      %328 = vmin.xlane.f32.xlu0 %v327
      %v329 = vpop.xlane.xlu0 %328
      %v330 = vcvt.f32.s32 %v329
      %v331 = vcvt.f32.s32 %v325
      %v332 = vshll.u32 %v331, 16
      %v333 = vadd.s32 %v332, %v330
      %vm334 = vcmp.eq.s32.totalorder %v241, %v318
      %vm335 = vcmp.eq.s32.totalorder %v241, %v333
      %v337 = vlaneseq
      %v338 = vshrl.u32 %v337, 7
      %v339 = vsub.s32 0, %v338
      %v340 = vrot.slane %v299, %v339
      %v342 = vsel %vm334, %v340, 0.0
      %v343 = vsel %vm335, %v340, 0.0
      %v344 = vsel %vm242, %v342, 0.0
      %345 = vadd.xlane.f32.xlu0 %v344
      %v346 = vpop.xlane.xlu0 %345
      %v347 = vsel %vm242, %v343, 0.0
      %348 = vadd.xlane.f32.xlu0 %v347
      %v349 = vpop.xlane.xlu0 %348
      %v350 = vmul.f32 %v346, %v297
      %v351 = vmul.f32 %v349, %v298
      %s352 = smul.u32 %s14, 16
      %v353 = vlaneseq
      %v354 = vshrl.u32 %v353, 7
      %v355 = vadd.s32 %v354, 8
      %v356 = vstv %s352
      %v357 = vadd.s32 %v356, %v354
      %v358 = vadd.s32 %v356, %v355
      %vm359 = vcmp.lt.s32.totalorder %v357, 37
      %vm360 = vcmp.lt.s32.totalorder %v358, 37
      %v361 = vsel %vm359, %v350, 0.0
      %v362 = vsel %vm360, %v351, 0.0
      %vm363 = vcmask 7168
      %364 = vst.msk [vmem:[%s234] sm:$0xff] %vm363, %v361
      %365 = vst.msk [vmem:[%s234 + $0x8] sm:$0xff] %vm363, %v362
      %s366 = smul.u32 2, %s14
      %p367 = scmp.lt.s32.totalorder %s366, 5
      %s368 = scalar_select %p367, %s366, 5
      %s369 = smul.addr %s368, 8
      %s370 = scalar_lea.vmem %s3, %s369
      // Predicated region
      $region33: #{tpu_custom_call.1} parent=31 // pred_check
        %p371 = pneg %p105
      $region34: #{tpu_custom_call.1} parent=31 // pred_check_branch
        %373 = sbr.rel (%p371) target = $region36
      $region35: #{tpu_custom_call.1} parent=31 // pred_region
        %s374 = smul.u32 2, %s14
      $region36: #{tpu_custom_call.1} parent=31 // pred_fallthru
        _
    $region32: #{tpu_custom_call.1} parent=5 // pred_fallthru
      _
    %p375 = scmp.le.s32.totalorder 2, %s9
    // Predicated region
    $region37: #{tpu_custom_call.1} parent=5 // pred_check
      %p376 = pneg %p375
    $region38: #{tpu_custom_call.1} parent=5 // pred_check_branch
      %378 = sbr.rel (%p376) target = $region40
    $region39: #{tpu_custom_call.1} parent=5 // pred_region
      %s379 = ssub.s32 %s9, 2
      // Predicated region
      $region41: #{tpu_custom_call.1} parent=39 // pred_check
        %p380 = pneg %p111
      $region42: #{tpu_custom_call.1} parent=39 // pred_check_branch
        %382 = sbr.rel (%p380) target = $region44
      $region43: #{tpu_custom_call.1} parent=39 // pred_region
        %s383 = smul.u32 2, %s15
        %p384 = scmp.lt.s32.totalorder %s383, 5
        %s385 = scalar_select %p384, %s383, 5
        %s386 = smul.addr %s385, 8
        %s387 = scalar_lea.vmem %s3, %s386
      $region44: #{tpu_custom_call.1} parent=39 // pred_fallthru
        _
    $region40: #{tpu_custom_call.1} parent=5 // pred_fallthru
      _
  $region6: #{tpu_custom_call.1} parent=0 // loop_footer
    %s13 = sadd.s32 1, %s9
  $region7: #{tpu_custom_call.1} parent=0 // loop_footer_branch
    %8 = sbr.rel target = $region3
  $region8: #{tpu_custom_call.1} parent=0 // loop_exit
    _

</llo_original>
